<compile_context>
chip_gen: v7x
topology: tpu7x:2x2x1
jax: 0.10.0
libtpu: 0.0.40
codegen_flags: <defaults>
</compile_context>

<pallas_src>
import jax
import jax.numpy as jnp
from jax.experimental import pallas as pl
from jax.experimental.pallas import tpu as pltpu


def _round_up(x, m):
    return (x + m - 1) // m * m


def _mlp_body(x, w1, b1, drop, w2, b2):
    # fc1: bf16 MXU matmul, f32 accumulate, + bias
    h = jnp.dot(x, w1, preferred_element_type=jnp.float32) + b1
    # LeakyReLU(0.2)
    h = jnp.where(h >= 0.0, h, 0.2 * h)
    # Inverted dropout (training only): multiplier is 0 or 1/keep_prob.
    if drop is not None:
        h = h * drop.astype(jnp.float32)
    # fc2 + bias, then ReLU
    h = jnp.dot(h.astype(jnp.bfloat16), w2,
                preferred_element_type=jnp.float32) + b2
    return jnp.maximum(h, 0.0)


def _kernel_train(x_ref, w1_ref, b1_ref, drop_ref, w2_ref, b2_ref, o_ref):
    o_ref[...] = _mlp_body(x_ref[...], w1_ref[...], b1_ref[...],
                           drop_ref[...], w2_ref[...], b2_ref[...])


def _kernel_eval(x_ref, w1_ref, b1_ref, w2_ref, b2_ref, o_ref):
    o_ref[...] = _mlp_body(x_ref[...], w1_ref[...], b1_ref[...],
                           None, w2_ref[...], b2_ref[...])


def mlp_dropout_g(noise, att, params, *, key=None, training=True, tile_b=256):
    """Forward pass of MLP_Dropout_G as one batch-tiled Pallas kernel.

    params = (w1, b1, w2, b2) with weights stored [in_features, out_features]
    (transposed relative to PyTorch's nn.Linear.weight)."""
    w1, b1, w2, b2 = params
    x = jnp.concatenate([noise, att], axis=1).astype(jnp.float32)

    B, d_in = x.shape
    ngh = w1.shape[1]
    res = w2.shape[1]

    # Lane-dense padding: features -> multiples of 128, batch -> multiple of 8.
    d_in_p = _round_up(d_in, 128)
    ngh_p = _round_up(ngh, 128)
    res_p = _round_up(res, 128)
    b8 = _round_up(B, 8)
    tb = min(tile_b, b8)            # batch tile (always a multiple of 8)
    b_p = _round_up(b8, tb)
    grid = (b_p // tb,)

    # Zero-padded, bf16-cast operands (zero pad rows/cols contribute nothing).
    x_p = jnp.zeros((b_p, d_in_p), jnp.bfloat16).at[:B, :d_in].set(
        x.astype(jnp.bfloat16))
    w1_p = jnp.zeros((d_in_p, ngh_p), jnp.bfloat16).at[:d_in, :ngh].set(
        w1.astype(jnp.bfloat16))
    b1_p = jnp.zeros((1, ngh_p), jnp.float32).at[0, :ngh].set(
        b1.reshape(-1).astype(jnp.float32))
    w2_p = jnp.zeros((ngh_p, res_p), jnp.bfloat16).at[:ngh, :res].set(
        w2.astype(jnp.bfloat16))
    b2_p = jnp.zeros((1, res_p), jnp.float32).at[0, :res].set(
        b2.reshape(-1).astype(jnp.float32))

    # VMEM budget: resident weights/biases + double-buffered streamed tiles.
    weight_bytes = (w1_p.size + w2_p.size) * 2 + (b1_p.size + b2_p.size) * 4
    act_bytes = 2 * (tb * d_in_p * 2 + tb * ngh_p * 2 + tb * res_p * 4)
    vmem_limit = int(min(max(2 * (weight_bytes + act_bytes), 16 * 2**20),
                         48 * 2**20))

    common_specs_pre = [
        pl.BlockSpec((tb, d_in_p), lambda i: (i, 0)),      # x: batch-tiled
        pl.BlockSpec((d_in_p, ngh_p), lambda i: (0, 0)),   # w1: resident
        pl.BlockSpec((1, ngh_p), lambda i: (0, 0)),        # b1: resident
    ]
    common_specs_post = [
        pl.BlockSpec((ngh_p, res_p), lambda i: (0, 0)),    # w2: resident
        pl.BlockSpec((1, res_p), lambda i: (0, 0)),        # b2: resident
    ]
    out_spec = pl.BlockSpec((tb, res_p), lambda i: (i, 0))
    compiler_params = pltpu.CompilerParams(
        dimension_semantics=("parallel",),
        vmem_limit_bytes=vmem_limit,
    )

    if training:
        # Inverted dropout (p = 0.2 -> keep 0.8, survivors scaled by 1.25).
        # 0.0 and 1.25 are exactly representable in bf16 -> stream in bf16.
        keep_prob = 0.8
        if key is None:
            key = jax.random.PRNGKey(0)
        u = jax.random.uniform(key, (b_p, ngh_p), dtype=jnp.float32)
        drop = ((u < keep_prob).astype(jnp.float32)
                * (1.0 / keep_prob)).astype(jnp.bfloat16)

        out_p = pl.pallas_call(
            _kernel_train,
            out_shape=jax.ShapeDtypeStruct((b_p, res_p), jnp.float32),
            grid=grid,
            in_specs=common_specs_pre
            + [pl.BlockSpec((tb, ngh_p), lambda i: (i, 0))]   # dropout mult.
            + common_specs_post,
            out_specs=out_spec,
            compiler_params=compiler_params,
        )(x_p, w1_p, b1_p, drop, w2_p, b2_p)
    else:
        out_p = pl.pallas_call(
            _kernel_eval,
            out_shape=jax.ShapeDtypeStruct((b_p, res_p), jnp.float32),
            grid=grid,
            in_specs=common_specs_pre + common_specs_post,
            out_specs=out_spec,
            compiler_params=compiler_params,
        )(x_p, w1_p, b1_p, w2_p, b2_p)

    return out_p[:B, :res]


def init_params(key, att_size, nz, ngh, res_size):
    """weights_init: Linear W ~ N(0, 0.02), b = 0. Stored [in, out]."""
    k1, k2 = jax.random.split(key)
    w1 = 0.02 * jax.random.normal(k1, (att_size + nz, ngh), dtype=jnp.float32)
    b1 = jnp.zeros((ngh,), jnp.float32)
    w2 = 0.02 * jax.random.normal(k2, (ngh, res_size), dtype=jnp.float32)
    b2 = jnp.zeros((res_size,), jnp.float32)
    return (w1, b1, w2, b2)


def _reference_eval(noise, att, params):
    """Pure-JAX reference (eval mode, same bf16 casts as the kernel)."""
    w1, b1, w2, b2 = params
    x = jnp.concatenate([noise, att], axis=1).astype(jnp.bfloat16)
    h = jnp.dot(x, w1.astype(jnp.bfloat16),
                preferred_element_type=jnp.float32) + b1
    h = jnp.where(h >= 0.0, h, 0.2 * h)
    h = jnp.dot(h.astype(jnp.bfloat16), w2.astype(jnp.bfloat16),
                preferred_element_type=jnp.float32) + b2
    return jnp.maximum(h, 0.0)


if __name__ == "__main__":
    # Small shapes consistent with the module: opt.attSize, opt.nz, opt.ngh, opt.resSize
    B, ATT_SIZE, NZ, NGH, RES_SIZE = 4, 16, 8, 32, 64

    root = jax.random.PRNGKey(0)
    k_noise, k_att, k_params, k_drop = jax.random.split(root, 4)
    noise = jax.random.normal(k_noise, (B, NZ), dtype=jnp.float32)
    att = jax.random.normal(k_att, (B, ATT_SIZE), dtype=jnp.float32)
    params = init_params(k_params, ATT_SIZE, NZ, NGH, RES_SIZE)

    # Eval-mode correctness check against a pure-JAX reference.
    out_eval = mlp_dropout_g(noise, att, params, training=False)
    jax.block_until_ready(out_eval)
    ref_eval = _reference_eval(noise, att, params)
    assert out_eval.shape == (B, RES_SIZE)
    assert bool(jnp.allclose(out_eval, ref_eval, atol=5e-2, rtol=5e-2))

    # Training-mode run (stochastic dropout): sanity assertions only.
    out = mlp_dropout_g(noise, att, params, key=k_drop, training=True)
    jax.block_until_ready(out)
    assert out.shape == (B, RES_SIZE)
    assert bool(jnp.all(jnp.isfinite(out)))
    assert bool(jnp.all(out >= 0.0))   # final ReLU => non-negative outputs
    print("KERNEL_OK")
</pallas_src>

<mosaic_0001>
module attributes {stable_mosaic.version = 11 : i64} {
  func.func @_kernel_eval(%arg0: i32, %arg1: memref<8x128xbf16, #tpu.memory_space<vmem>>, %arg2: memref<128x128xbf16, #tpu.memory_space<vmem>>, %arg3: memref<1x128xf32, #tpu.memory_space<vmem>>, %arg4: memref<128x128xbf16, #tpu.memory_space<vmem>>, %arg5: memref<1x128xf32, #tpu.memory_space<vmem>>, %arg6: memref<8x128xf32, #tpu.memory_space<vmem>>) attributes {dimension_semantics = [#tpu.dimension_semantics<parallel>], iteration_bounds = array<i64: 1>, scalar_prefetch = 0 : i64, scratch_operands = 0 : i64, tpu.core_type = #tpu.core_type<tc>, window_params = [{transform_indices = @transform_0, window_bounds = array<i64: 8, 128>}, {pipeline_mode = #tpu.pipeline_mode<synchronous>, transform_indices = @transform_1, window_bounds = array<i64: 128, 128>}, {pipeline_mode = #tpu.pipeline_mode<synchronous>, transform_indices = @transform_2, window_bounds = array<i64: 1, 128>}, {pipeline_mode = #tpu.pipeline_mode<synchronous>, transform_indices = @transform_3, window_bounds = array<i64: 128, 128>}, {pipeline_mode = #tpu.pipeline_mode<synchronous>, transform_indices = @transform_4, window_bounds = array<i64: 1, 128>}, {transform_indices = @transform_5, window_bounds = array<i64: 8, 128>}]} {
    %c0 = arith.constant 0 : index
    %c0_0 = arith.constant 0 : index
    %0 = vector.load %arg1[%c0, %c0_0] : memref<8x128xbf16, #tpu.memory_space<vmem>>, vector<8x128xbf16>
    %c0_1 = arith.constant 0 : index
    %c0_2 = arith.constant 0 : index
    %1 = vector.load %arg2[%c0_1, %c0_2] : memref<128x128xbf16, #tpu.memory_space<vmem>>, vector<128x128xbf16>
    %c0_3 = arith.constant 0 : index
    %c0_4 = arith.constant 0 : index
    %2 = vector.load %arg3[%c0_3, %c0_4] : memref<1x128xf32, #tpu.memory_space<vmem>>, vector<1x128xf32>
    %c0_5 = arith.constant 0 : index
    %c0_6 = arith.constant 0 : index
    %3 = vector.load %arg4[%c0_5, %c0_6] : memref<128x128xbf16, #tpu.memory_space<vmem>>, vector<128x128xbf16>
    %c0_7 = arith.constant 0 : index
    %c0_8 = arith.constant 0 : index
    %4 = vector.load %arg5[%c0_7, %c0_8] : memref<1x128xf32, #tpu.memory_space<vmem>>, vector<1x128xf32>
    %cst = arith.constant dense<0.000000e+00> : vector<8x128xf32>
    %5 = tpu.matmul %0, %1, %cst {dimension_numbers = #tpu.dot_dimension_numbers<[1], [0], [0], [1], [0, 0, 1, 1], [], []>} : vector<8x128xbf16>, vector<128x128xbf16>, vector<8x128xf32> -> vector<8x128xf32>
    %6 = vector.broadcast %2 : vector<1x128xf32> to vector<8x128xf32>
    %7 = arith.addf %5, %6 : vector<8x128xf32>
    %cst_9 = arith.constant 0.000000e+00 : f32
    %8 = vector.broadcast %cst_9 : f32 to vector<8x128xf32>
    %9 = arith.cmpf oge, %7, %8 : vector<8x128xf32>
    %cst_10 = arith.constant 2.000000e-01 : f32
    %10 = vector.broadcast %cst_10 : f32 to vector<8x128xf32>
    %11 = arith.mulf %10, %7 : vector<8x128xf32>
    %12 = arith.select %9, %7, %11 : vector<8x128xi1>, vector<8x128xf32>
    %13 = arith.truncf %12 : vector<8x128xf32> to vector<8x128xbf16>
    %cst_11 = arith.constant dense<0.000000e+00> : vector<8x128xf32>
    %14 = tpu.matmul %13, %3, %cst_11 {dimension_numbers = #tpu.dot_dimension_numbers<[1], [0], [0], [1], [0, 0, 1, 1], [], []>} : vector<8x128xbf16>, vector<128x128xbf16>, vector<8x128xf32> -> vector<8x128xf32>
    %15 = vector.broadcast %4 : vector<1x128xf32> to vector<8x128xf32>
    %16 = arith.addf %14, %15 : vector<8x128xf32>
    %cst_12 = arith.constant 0.000000e+00 : f32
    %17 = vector.broadcast %cst_12 : f32 to vector<8x128xf32>
    %18 = arith.maximumf %16, %17 : vector<8x128xf32>
    %c0_13 = arith.constant 0 : index
    %c0_14 = arith.constant 0 : index
    %19 = vector.load %arg6[%c0_13, %c0_14] : memref<8x128xf32, #tpu.memory_space<vmem>>, vector<8x128xf32>
    tpu.vector_store %arg6[%c0_13, %c0_14], %18 {strides = array<i32>} : memref<8x128xf32, #tpu.memory_space<vmem>>, vector<8x128xf32>,
    return
  }
  func.func @transform_0(%arg0: i32) -> (i32, i32) {
    %c0_i32 = arith.constant 0 : i32
    %c0_i32_0 = arith.constant 0 : i32
    return %arg0, %c0_i32 : i32, i32
  }
  func.func @transform_1(%arg0: i32) -> (i32, i32) {
    %c0_i32 = arith.constant 0 : i32
    %c0_i32_0 = arith.constant 0 : i32
    %c0_i32_1 = arith.constant 0 : i32
    return %c0_i32, %c0_i32_0 : i32, i32
  }
  func.func @transform_2(%arg0: i32) -> (i32, i32) {
    %c0_i32 = arith.constant 0 : i32
    %c0_i32_0 = arith.constant 0 : i32
    %c0_i32_1 = arith.constant 0 : i32
    return %c0_i32, %c0_i32_0 : i32, i32
  }
  func.func @transform_3(%arg0: i32) -> (i32, i32) {
    %c0_i32 = arith.constant 0 : i32
    %c0_i32_0 = arith.constant 0 : i32
    %c0_i32_1 = arith.constant 0 : i32
    return %c0_i32, %c0_i32_0 : i32, i32
  }
  func.func @transform_4(%arg0: i32) -> (i32, i32) {
    %c0_i32 = arith.constant 0 : i32
    %c0_i32_0 = arith.constant 0 : i32
    %c0_i32_1 = arith.constant 0 : i32
    return %c0_i32, %c0_i32_0 : i32, i32
  }
  func.func @transform_5(%arg0: i32) -> (i32, i32) {
    %c0_i32 = arith.constant 0 : i32
    %c0_i32_0 = arith.constant 0 : i32
    return %arg0, %c0_i32 : i32, i32
  }
}

</mosaic_0001>

<llo_original>
// kernel: tpu_custom_call.1
$region0: #{tpu_custom_call.1}
  #allocation0 [shape = 'u32[]', space=smem, size = 0x4, offset = 0x4, fixed_abs, tag = 'smem constant byte address 0x4 - core index']
  #allocation1 [shape = 'u32[144,128]{1,0:T(1,128)}', space=vmem, size = 0x12000, scoped, tag = 'internal scratch']
  %s0 = inlined_call_operand.hbm [shape: bf16[8,128], index: 0, kind: input, shape index: {}]
  %s1 = inlined_call_operand.hbm [shape: bf16[128,128], index: 1, kind: input, shape index: {}]
  %s2 = inlined_call_operand.vmem [shape: f32[1,128], index: 2, kind: input, shape index: {}]
  %s3 = inlined_call_operand.hbm [shape: bf16[128,128], index: 3, kind: input, shape index: {}]
  %s4 = inlined_call_operand.vmem [shape: f32[1,128], index: 4, kind: input, shape index: {}]
  %s5 = inlined_call_operand.hbm [shape: f32[8,128], index: 5, kind: output, shape index: {}]
  %s6 = sld [smem:[#allocation0]]
  $region42: #{tpu_custom_call.1} parent=0
    _
  %s8 = ssub.s32 1, %s6
  %s9 = scalar_select 0, %s8, %s6
  $region1: #{tpu_custom_call.1} parent=0
    #allocation2 [shape = 'u8[2048]{0}', space=vmem, size = 0x800, scoped, tag = 'input window, operand 0, single buffered']
    #allocation3 [shape = 's32[1]{0}', space=sflag, size = 0x4, scoped, tag = 'scoped memory for tpu_custom_call.1']
    #allocation4 [shape = 's32[1]{0}', space=sflag, size = 0x4, scoped, tag = 'scoped memory for tpu_custom_call.1']
    #allocation5 [shape = 'u8[32768]{0}', space=vmem, size = 0x8000, scoped, tag = 'input window, operand 1, single buffered']
    #allocation6 [shape = 's32[1]{0}', space=sflag, size = 0x4, scoped, tag = 'scoped memory for tpu_custom_call.1']
    #allocation7 [shape = 'u8[32768]{0}', space=vmem, size = 0x8000, scoped, tag = 'input window, operand 3, single buffered']
    #allocation8 [shape = 'u8[4096]{0}', space=vmem, size = 0x1000, scoped, tag = 'output window, operand 0, single buffered']
    %10 = vsyncpa [#allocation3], 0
    %11 = vsyncpa [#allocation6], 0
    %12 = vsyncpa [#allocation4], 0
    // Predicated region
    $region2: #{tpu_custom_call.1} parent=1 // pred_check
      _
    $region3: #{tpu_custom_call.1} parent=1 // pred_check_branch
      %14 = sbr.rel (0) target = $region5
    $region4: #{tpu_custom_call.1} parent=1 // pred_region
      %s16 = ssub.s32 64, 64
      %17 = vsyncadd [#allocation3], %s16
      %s19 = sshll.u32 [#allocation2], 4
      %s20 = int_to_ptr.vmem [resolvable:$true] %s19
      %22 = dma.hbm_to_vmem [thread:$0]  %s0, 64, %s20, [#allocation3]
    $region5: #{tpu_custom_call.1} parent=1 // pred_fallthru
      _
    // Predicated region
    $region6: #{tpu_custom_call.1} parent=1 // pred_check
      _
    $region7: #{tpu_custom_call.1} parent=1 // pred_check_branch
      %24 = sbr.rel (0) target = $region9
    $region8: #{tpu_custom_call.1} parent=1 // pred_region
      %s26 = ssub.s32 1024, 1024
      %27 = vsyncadd [#allocation6], %s26
      %s28 = sshll.u32 [#allocation5], 4
      %s29 = int_to_ptr.vmem [resolvable:$true] %s28
      %34 = dma.hbm_to_vmem [thread:$0]  %s1, 1024, %s29, [#allocation6], 64, 64, 4
    $region9: #{tpu_custom_call.1} parent=1 // pred_fallthru
      _
    // Predicated region
    $region10: #{tpu_custom_call.1} parent=1 // pred_check
      _
    $region11: #{tpu_custom_call.1} parent=1 // pred_check_branch
      %36 = sbr.rel (0) target = $region13
    $region12: #{tpu_custom_call.1} parent=1 // pred_region
      _
    $region13: #{tpu_custom_call.1} parent=1 // pred_fallthru
      _
    // Predicated region
    $region14: #{tpu_custom_call.1} parent=1 // pred_check
      _
    $region15: #{tpu_custom_call.1} parent=1 // pred_check_branch
      %38 = sbr.rel (0) target = $region17
    $region16: #{tpu_custom_call.1} parent=1 // pred_region
      %s40 = ssub.s32 1024, 1024
      %41 = vsyncadd [#allocation6], %s40
      %s42 = sshll.u32 [#allocation7], 4
      %s43 = int_to_ptr.vmem [resolvable:$true] %s42
      %48 = dma.hbm_to_vmem [thread:$0]  %s3, 1024, %s43, [#allocation6], 64, 64, 4
    $region17: #{tpu_custom_call.1} parent=1 // pred_fallthru
      _
    // Predicated region
    $region18: #{tpu_custom_call.1} parent=1 // pred_check
      _
    $region19: #{tpu_custom_call.1} parent=1 // pred_check_branch
      %50 = sbr.rel (0) target = $region21
    $region20: #{tpu_custom_call.1} parent=1 // pred_region
      _
    $region21: #{tpu_custom_call.1} parent=1 // pred_fallthru
      _
    // Predicated region
    $region22: #{tpu_custom_call.1} parent=1 // pred_check
      _
    $region23: #{tpu_custom_call.1} parent=1 // pred_check_branch
      %52 = sbr.rel (0) target = $region25
    $region24: #{tpu_custom_call.1} parent=1 // pred_region
      %53 = dma.done [#allocation3], 64
    $region25: #{tpu_custom_call.1} parent=1 // pred_fallthru
      _
    // Predicated region
    $region26: #{tpu_custom_call.1} parent=1 // pred_check
      _
    $region27: #{tpu_custom_call.1} parent=1 // pred_check_branch
      %55 = sbr.rel (0) target = $region29
    $region28: #{tpu_custom_call.1} parent=1 // pred_region
      %56 = dma.done [#allocation6], 1024
    $region29: #{tpu_custom_call.1} parent=1 // pred_fallthru
      _
    // Predicated region
    $region30: #{tpu_custom_call.1} parent=1 // pred_check
      _
    $region31: #{tpu_custom_call.1} parent=1 // pred_check_branch
      %58 = sbr.rel (0) target = $region33
    $region32: #{tpu_custom_call.1} parent=1 // pred_region
      %59 = dma.done [#allocation6], 1024
    $region33: #{tpu_custom_call.1} parent=1 // pred_fallthru
      _
    %v61 = vld [vmem:[#allocation2] sm:$0xf]
    %v62 = vld [vmem:[#allocation5] sm:$0xf]
    %v63 = vld [vmem:[#allocation5 + $0x4] sm:$0xf]
    %v64 = vld [vmem:[#allocation5 + $0x8] sm:$0xf]
    %v65 = vld [vmem:[#allocation5 + $0xc] sm:$0xf]
    %v66 = vld [vmem:[#allocation5 + $0x10] sm:$0xf]
    %v67 = vld [vmem:[#allocation5 + $0x14] sm:$0xf]
    %v68 = vld [vmem:[#allocation5 + $0x18] sm:$0xf]
    %v69 = vld [vmem:[#allocation5 + $0x1c] sm:$0xf]
    %v70 = vld [vmem:[#allocation5 + $0x20] sm:$0xf]
    %v71 = vld [vmem:[#allocation5 + $0x24] sm:$0xf]
    %v72 = vld [vmem:[#allocation5 + $0x28] sm:$0xf]
    %v73 = vld [vmem:[#allocation5 + $0x2c] sm:$0xf]
    %v74 = vld [vmem:[#allocation5 + $0x30] sm:$0xf]
    %v75 = vld [vmem:[#allocation5 + $0x34] sm:$0xf]
    %v76 = vld [vmem:[#allocation5 + $0x38] sm:$0xf]
    %v77 = vld [vmem:[#allocation5 + $0x3c] sm:$0xf]
    %v78 = vld [vmem:[%s2] sm:$0x1]
    %v79 = vld [vmem:[#allocation7] sm:$0xf]
    %v80 = vld [vmem:[#allocation7 + $0x4] sm:$0xf]
    %v81 = vld [vmem:[#allocation7 + $0x8] sm:$0xf]
    %v82 = vld [vmem:[#allocation7 + $0xc] sm:$0xf]
    %v83 = vld [vmem:[#allocation7 + $0x10] sm:$0xf]
    %v84 = vld [vmem:[#allocation7 + $0x14] sm:$0xf]
    %v85 = vld [vmem:[#allocation7 + $0x18] sm:$0xf]
    %v86 = vld [vmem:[#allocation7 + $0x1c] sm:$0xf]
    %v87 = vld [vmem:[#allocation7 + $0x20] sm:$0xf]
    %v88 = vld [vmem:[#allocation7 + $0x24] sm:$0xf]
    %v89 = vld [vmem:[#allocation7 + $0x28] sm:$0xf]
    %v90 = vld [vmem:[#allocation7 + $0x2c] sm:$0xf]
    %v91 = vld [vmem:[#allocation7 + $0x30] sm:$0xf]
    %v92 = vld [vmem:[#allocation7 + $0x34] sm:$0xf]
    %v93 = vld [vmem:[#allocation7 + $0x38] sm:$0xf]
    %v94 = vld [vmem:[#allocation7 + $0x3c] sm:$0xf]
    %v95 = vld [vmem:[%s4] sm:$0x1]
    %v97 = vlaneseq
    %v98 = vshrl.u32 %v97, 7
    %v99 = vsub.s32 0, %v98
    %v100 = vrot.slane %v78, %v99
    %v118 = vunpack.c.l.b16 %v62
    %v119 = vunpack.c.l.b16 %v63
    %v120 = vunpack.c.l.b16 %v64
    %v121 = vunpack.c.l.b16 %v65
    %v122 = vunpack.c.l.b16 %v66
    %v123 = vunpack.c.l.b16 %v67
    %v124 = vunpack.c.l.b16 %v68
    %v125 = vunpack.c.l.b16 %v69
    %v126 = vunpack.c.l.b16 %v70
    %v127 = vunpack.c.l.b16 %v71
    %v128 = vunpack.c.l.b16 %v72
    %v129 = vunpack.c.l.b16 %v73
    %v130 = vunpack.c.l.b16 %v74
    %v131 = vunpack.c.l.b16 %v75
    %v132 = vunpack.c.l.b16 %v76
    %v133 = vunpack.c.l.b16 %v77
    %v134 = vpack.c.b16 %v119, %v118
    %v135 = vpack.c.b16 %v121, %v120
    %v136 = vpack.c.b16 %v123, %v122
    %v137 = vpack.c.b16 %v125, %v124
    %v138 = vpack.c.b16 %v127, %v126
    %v139 = vpack.c.b16 %v129, %v128
    %v140 = vpack.c.b16 %v131, %v130
    %v141 = vpack.c.b16 %v133, %v132
    %150 = vmatprep.subr.bf16.mxu0 0
    %151 = vmatpush1.bf16.msra.mxu0 %v134
    %152 = vmatprep.subr.bf16.mxu0 0
    %153 = vmatpush1.bf16.msra.mxu0 %v135
    %154 = vmatprep.subr.bf16.mxu0 0
    %155 = vmatpush1.bf16.msra.mxu0 %v136
    %156 = vmatprep.subr.bf16.mxu0 0
    %157 = vmatpush1.bf16.msra.mxu0 %v137
    %158 = vmatprep.subr.bf16.mxu0 0
    %159 = vmatpush1.bf16.msra.mxu0 %v138
    %160 = vmatprep.subr.bf16.mxu0 0
    %161 = vmatpush1.bf16.msra.mxu0 %v139
    %162 = vmatprep.subr.bf16.mxu0 0
    %163 = vmatpush1.bf16.msra.mxu0 %v140
    %164 = vmatprep.subr.bf16.mxu0 0
    %165 = vmatpush1.bf16.msra.mxu0 %v141
    %166 = vmatprep.subr.bf16.mxu0 0
    %167 = vmatpush1.bf16.msra.mxu0 0
    %168 = vmatprep.subr.bf16.mxu0 0
    %169 = vmatpush1.bf16.msra.mxu0 0
    %170 = vmatprep.subr.bf16.mxu0 0
    %171 = vmatpush1.bf16.msra.mxu0 0
    %172 = vmatprep.subr.bf16.mxu0 0
    %173 = vmatpush1.bf16.msra.mxu0 0
    %174 = vmatprep.subr.bf16.mxu0 0
    %175 = vmatpush1.bf16.msra.mxu0 0
    %176 = vmatprep.subr.bf16.mxu0 0
    %177 = vmatpush1.bf16.msra.mxu0 0
    %178 = vmatprep.subr.bf16.mxu0 0
    %179 = vmatpush1.bf16.msra.mxu0 0
    %180 = vmatprep.subr.bf16.mxu0 0
    %181 = vmatpush1.bf16.msra.mxu0 0
    %182 = vmatprep.mubr.bf16.mxu0 0
    %183 = vmatmul.mubr.bf16.gmra.mrb[0].mxu0 %v61
    %v184 = vpop.f32.mrb[0].mxu0
    %v185 = vadd.f32 %v100, %v184
    %v186 = vpop.f32.mrb[0].mxu0
    %v187 = vpop.f32.mrb[0].mxu0
    %v188 = vpop.f32.mrb[0].mxu0
    %189 = vdwg.mxu0
    %vm190 = vcmp.ge.f32.partialorder %v185, 0.0
    %v191 = vmul.f32 %v185, 0.2
    %v192 = vsel %vm190, %v185, %v191
    %v193 = vpack.c.bf16 %v192, %v192
    %v195 = vlaneseq
    %v196 = vshrl.u32 %v195, 7
    %v197 = vsub.s32 0, %v196
    %v198 = vrot.slane %v95, %v197
    %v216 = vunpack.c.l.b16 %v79
    %v217 = vunpack.c.l.b16 %v80
    %v218 = vunpack.c.l.b16 %v81
    %v219 = vunpack.c.l.b16 %v82
    %v220 = vunpack.c.l.b16 %v83
    %v221 = vunpack.c.l.b16 %v84
    %v222 = vunpack.c.l.b16 %v85
    %v223 = vunpack.c.l.b16 %v86
    %v224 = vunpack.c.l.b16 %v87
    %v225 = vunpack.c.l.b16 %v88
    %v226 = vunpack.c.l.b16 %v89
    %v227 = vunpack.c.l.b16 %v90
    %v228 = vunpack.c.l.b16 %v91
    %v229 = vunpack.c.l.b16 %v92
    %v230 = vunpack.c.l.b16 %v93
    %v231 = vunpack.c.l.b16 %v94
    %v232 = vpack.c.b16 %v217, %v216
    %v233 = vpack.c.b16 %v219, %v218
    %v234 = vpack.c.b16 %v221, %v220
    %v235 = vpack.c.b16 %v223, %v222
    %v236 = vpack.c.b16 %v225, %v224
    %v237 = vpack.c.b16 %v227, %v226
    %v238 = vpack.c.b16 %v229, %v228
    %v239 = vpack.c.b16 %v231, %v230
    %248 = vmatprep.subr.bf16.mxu0 0
    %249 = vmatpush1.bf16.msra.mxu0 %v232
    %250 = vmatprep.subr.bf16.mxu0 0
    %251 = vmatpush1.bf16.msra.mxu0 %v233
    %252 = vmatprep.subr.bf16.mxu0 0
    %253 = vmatpush1.bf16.msra.mxu0 %v234
    %254 = vmatprep.subr.bf16.mxu0 0
    %255 = vmatpush1.bf16.msra.mxu0 %v235
    %256 = vmatprep.subr.bf16.mxu0 0
    %257 = vmatpush1.bf16.msra.mxu0 %v236
    %258 = vmatprep.subr.bf16.mxu0 0
    %259 = vmatpush1.bf16.msra.mxu0 %v237
    %260 = vmatprep.subr.bf16.mxu0 0
    %261 = vmatpush1.bf16.msra.mxu0 %v238
    %262 = vmatprep.subr.bf16.mxu0 0
    %263 = vmatpush1.bf16.msra.mxu0 %v239
    %264 = vmatprep.subr.bf16.mxu0 0
    %265 = vmatpush1.bf16.msra.mxu0 0
    %266 = vmatprep.subr.bf16.mxu0 0
    %267 = vmatpush1.bf16.msra.mxu0 0
    %268 = vmatprep.subr.bf16.mxu0 0
    %269 = vmatpush1.bf16.msra.mxu0 0
    %270 = vmatprep.subr.bf16.mxu0 0
    %271 = vmatpush1.bf16.msra.mxu0 0
    %272 = vmatprep.subr.bf16.mxu0 0
    %273 = vmatpush1.bf16.msra.mxu0 0
    %274 = vmatprep.subr.bf16.mxu0 0
    %275 = vmatpush1.bf16.msra.mxu0 0
    %276 = vmatprep.subr.bf16.mxu0 0
    %277 = vmatpush1.bf16.msra.mxu0 0
    %278 = vmatprep.subr.bf16.mxu0 0
    %279 = vmatpush1.bf16.msra.mxu0 0
    %280 = vmatprep.mubr.bf16.mxu0 0
    %281 = vmatmul.mubr.bf16.gmra.mrb[0].mxu0 %v193
    %v282 = vpop.f32.mrb[0].mxu0
    %v283 = vadd.f32 %v198, %v282
    %v284 = vpop.f32.mrb[0].mxu0
    %v285 = vpop.f32.mrb[0].mxu0
    %v286 = vpop.f32.mrb[0].mxu0
    %287 = vdwg.mxu0
    %v288 = vmax.f32 %v283, 0.0
    %289 = vst [vmem:[#allocation8] sm:$0xff] %v288
    // Predicated region
    $region34: #{tpu_custom_call.1} parent=1 // pred_check
      _
    $region35: #{tpu_custom_call.1} parent=1 // pred_check_branch
      %291 = sbr.rel (0) target = $region37
    $region36: #{tpu_custom_call.1} parent=1 // pred_region
      %s293 = ssub.s32 128, 128
      %294 = vsyncadd [#allocation4], %s293
      %s296 = sshll.u32 [#allocation8], 4
      %s297 = int_to_ptr.vmem [resolvable:$true] %s296
      %299 = dma.vmem_to_hbm [thread:$0]  %s297, 128, %s5, [#allocation4]
    $region37: #{tpu_custom_call.1} parent=1 // pred_fallthru
      _
    // Predicated region
    $region38: #{tpu_custom_call.1} parent=1 // pred_check
      _
    $region39: #{tpu_custom_call.1} parent=1 // pred_check_branch
      %301 = sbr.rel (0) target = $region41
    $region40: #{tpu_custom_call.1} parent=1 // pred_region
      %302 = dma.done [#allocation4], 128
    $region41: #{tpu_custom_call.1} parent=1 // pred_fallthru
      _
    %303 = vsyncpa [#allocation3], 1
    %304 = vsyncpa [#allocation6], 1
    %305 = vsyncpa [#allocation4], 1

</llo_original>
